<compile_context>
chip_gen: v6e
topology: v6e:2x2x1
jax: 0.10.0
libtpu: 0.0.40
codegen_flags: <defaults>
</compile_context>

<pallas_src>
import functools

import jax
import jax.numpy as jnp
from jax.experimental import pallas as pl
from jax.experimental.pallas import tpu as pltpu

ALPHA_D = 0.2
KERNEL_SIZE = 5
PADDING = KERNEL_SIZE // 2  # 'same' circular padding


def _leaky_relu(v, alpha):
    return jnp.where(v >= 0, v, alpha * v)


# ---------------------------------------------------------------------------
# Fused Pallas kernel:
#   h   = CircConv1d(LeakyReLU(x), w1) + b1      (register/VMEM value, haloed)
#   out = CircConv1d(LeakyReLU(h), w2) + b2      (single store to o_ref)
#
#   x_ref  : (TN, Cin, L)        unpadded input tile
#   w1_ref : (Cout, K*Cin)       im2col-folded weights: w1m[o, k*C + c] = w1[o,c,k]
#   b1_ref : (Cout, 1)
#   w2_ref : (Cout, K*Cout)      im2col-folded weights for layer 2
#   b2_ref : (Cout, 1)
#   o_ref  : (TN, Cout, L)       output tile
# ---------------------------------------------------------------------------
def _res_d_fused_kernel(x_ref, w1_ref, b1_ref, w2_ref, b2_ref, o_ref, *,
                        alpha, ksize):
    pad = ksize // 2
    length = o_ref.shape[-1]
    lh = length + 2 * pad            # width of the haloed layer-1 intermediate

    # ---- build the 2*pad circular halo in VMEM (no HBM pre-pad) -------------
    x = x_ref[...].astype(jnp.float32)                         # (TN, Cin, L)
    xw = jnp.concatenate(
        [x[:, :, length - 2 * pad:], x, x[:, :, :2 * pad]], axis=-1)
    # xw: (TN, Cin, L + 4*pad), circularly wrapped by 2*pad per side.

    # ---- layer 1: LeakyReLU -> one fused im2col contraction -----------------
    y1 = _leaky_relu(xw, alpha)
    y1_cat = jnp.concatenate(
        [y1[:, :, k:k + lh] for k in range(ksize)], axis=1)    # (TN, K*Cin, Lh)
    w1 = w1_ref[...].astype(jnp.float32)                       # (Cout, K*Cin)
    b1 = b1_ref[...].astype(jnp.float32)                       # (Cout, 1)
    h = jnp.einsum("oc,ncl->nol", w1, y1_cat,
                   preferred_element_type=jnp.float32) + b1[None, :, :]
    # h: (TN, Cout, L + 2*pad); halo columns equal the true circular wrap.

    # ---- layer 2: consume the resident intermediate, store once -------------
    y2 = _leaky_relu(h, alpha)                                  # (TN, Cout, Lh)
    y2_cat = jnp.concatenate(
        [y2[:, :, k:k + length] for k in range(ksize)], axis=1)  # (TN,K*Cout,L)
    w2 = w2_ref[...].astype(jnp.float32)                        # (Cout, K*Cout)
    b2 = b2_ref[...].astype(jnp.float32)
    out = jnp.einsum("oc,ncl->nol", w2, y2_cat,
                     preferred_element_type=jnp.float32) + b2[None, :, :]

    o_ref[...] = out.astype(o_ref.dtype)     # single output store, no RMW


# ---------------------------------------------------------------------------
# Generation-aware tiling.
# ---------------------------------------------------------------------------
def _vmem_capacity_bytes():
    try:
        info = pltpu.get_tpu_info()
        cap = getattr(info, "vmem_capacity_bytes", None)
        if cap:
            return int(cap)
    except Exception:
        pass
    return 64 << 20  # conservative fallback (v7x per-TensorCore physical VMEM)


def _per_row_f32_bytes(cin, cout, length, ksize):
    """Upper-bound f32 VMEM footprint per batch row, incl. 2x double-buffered
    I/O blocks and the im2col temporaries."""
    pad = ksize // 2
    lh = length + 2 * pad
    elems = (
        2 * cin * length            # input block (double-buffered by Pallas)
        + 2 * cout * length         # output block (double-buffered)
        + cin * (length + 4 * pad)  # circularly-wrapped input value
        + ksize * cin * lh          # layer-1 im2col stack
        + 2 * cout * lh             # h + LeakyReLU(h)
        + ksize * cout * length     # layer-2 im2col stack
        + cout * length             # layer-2 result before cast
    )
    return 4 * elems


def _choose_batch_tile(n, cin, cout, length, ksize):
    cap = _vmem_capacity_bytes()
    budget = cap // 4                      # headroom for weights / temporaries
    per_row = _per_row_f32_bytes(cin, cout, length, ksize)
    max_tn = max(1, min(n, budget // max(per_row, 1)))
    # Prefer >= 2 grid steps per TensorCore (v7x has 2 TCs sharded over the
    # 'parallel' axis) so DMA prefetch/writeback overlaps compute.
    if n >= 4:
        max_tn = max(1, min(max_tn, n // 4))
    elif n >= 2:
        max_tn = max(1, min(max_tn, n // 2))
    # Prefer a tile that divides N exactly (no batch padding / HBM concat).
    tn = 1
    for d in range(max_tn, 0, -1):
        if n % d == 0:
            tn = d
            break
    if tn < max(1, max_tn // 2):
        tn = max_tn   # a ragged (padded) last tile beats tiny tiles everywhere
    return int(tn), cap


def res_d_forward(x, w1, b1, w2, b2, *, alpha=ALPHA_D):
    """out = conv2(lrelu(conv1(lrelu(x)))), both convs circular 'same'."""
    n, cin, length = x.shape
    cout, cin_w, ksize = w1.shape
    assert cin == cin_w and w2.shape == (cout, cout, ksize)
    pad = ksize // 2
    assert length >= 2 * pad, "sequence must cover the circular halo"
    out_dtype = x.dtype

    tn, vmem_cap = _choose_batch_tile(n, cin, cout, length, ksize)
    n_tiles = pl.cdiv(n, tn)
    n_pad = n_tiles * tn
    if n_pad != n:
        # TODO(synk): replace with a clamped/overlapping last tile instead of
        # an HBM concatenate; only reached when N has no usable divisor.
        x = jnp.concatenate(
            [x, jnp.zeros((n_pad - n, cin, length), x.dtype)], axis=0)

    # Pre-fold the conv weights into im2col form (done once, tiny arrays):
    #   w_mat[o, k*C + c] = w[o, c, k]
    w1_mat = jnp.transpose(w1, (0, 2, 1)).reshape(cout, ksize * cin)
    w2_mat = jnp.transpose(w2, (0, 2, 1)).reshape(cout, ksize * cout)

    kernel = functools.partial(_res_d_fused_kernel, alpha=alpha, ksize=ksize)
    out = pl.pallas_call(
        kernel,
        out_shape=jax.ShapeDtypeStruct((n_pad, cout, length), out_dtype),
        grid=(n_tiles,),
        in_specs=[
            pl.BlockSpec((tn, cin, length), lambda i: (i, 0, 0)),
            pl.BlockSpec((cout, ksize * cin), lambda i: (0, 0)),
            pl.BlockSpec((cout, 1), lambda i: (0, 0)),
            pl.BlockSpec((cout, ksize * cout), lambda i: (0, 0)),
            pl.BlockSpec((cout, 1), lambda i: (0, 0)),
        ],
        out_specs=pl.BlockSpec((tn, cout, length), lambda i: (i, 0, 0)),
        compiler_params=pltpu.CompilerParams(
            dimension_semantics=("parallel",),
            vmem_limit_bytes=int(vmem_cap * 0.75),
        ),
    )(x, w1_mat, b1.reshape(cout, 1), w2_mat, b2.reshape(cout, 1))
    return out[:n]


# ---------------------------------------------------------------------------
# Parameter setup (plain JAX glue): deterministic init + spectral norm.
# ---------------------------------------------------------------------------
def spectral_normalize(w, key, n_iter=30, eps=1e-12):
    """Divide the conv weight by the spectral norm of its (Cout, Cin*K) matrix,
    approximating torch.nn.utils.parametrizations.spectral_norm at init."""
    w_mat = w.reshape(w.shape[0], -1)
    u = jax.random.normal(key, (w_mat.shape[0],), dtype=w.dtype)
    u = u / (jnp.linalg.norm(u) + eps)
    v = None
    for _ in range(n_iter):
        v = w_mat.T @ u
        v = v / (jnp.linalg.norm(v) + eps)
        u = w_mat @ v
        u = u / (jnp.linalg.norm(u) + eps)
    sigma = u @ (w_mat @ v)
    return w / sigma


def init_conv1d_params(key, in_ch, out_ch, ksize):
    """Uniform(-1/sqrt(fan_in), +1/sqrt(fan_in)) like torch Conv1d default."""
    kw, kb = jax.random.split(key)
    fan_in = in_ch * ksize
    bound = 1.0 / jnp.sqrt(jnp.asarray(fan_in, jnp.float32))
    w = jax.random.uniform(kw, (out_ch, in_ch, ksize), jnp.float32, -bound, bound)
    b = jax.random.uniform(kb, (out_ch,), jnp.float32, -bound, bound)
    return w, b


class ResD:
    """JAX/Pallas port of res_D.  self.mlp in the PyTorch module is never used
    by forward(), so it is not instantiated here."""

    def __init__(self, in_channels, out_channels, key):
        k1, k2, ku1, ku2 = jax.random.split(key, 4)
        w1, b1 = init_conv1d_params(k1, in_channels, out_channels, KERNEL_SIZE)
        w2, b2 = init_conv1d_params(k2, out_channels, out_channels, KERNEL_SIZE)
        self.w1 = spectral_normalize(w1, ku1)
        self.b1 = b1
        self.w2 = spectral_normalize(w2, ku2)
        self.b2 = b2

    def __call__(self, x):
        return res_d_forward(x, self.w1, self.b1, self.w2, self.b2)


# ---------------------------------------------------------------------------
# Pure-JAX reference (independent per-layer circular pad) for a numerics check.
# ---------------------------------------------------------------------------
def res_d_reference(x, w1, b1, w2, b2, *, alpha=ALPHA_D):
    def circ_conv(y, w, b):
        ksize = w.shape[-1]
        pad = ksize // 2
        length = y.shape[-1]
        yp = jnp.pad(y, ((0, 0), (0, 0), (pad, pad)), mode="wrap")
        out = jnp.zeros((y.shape[0], w.shape[0], length), jnp.float32)
        for k in range(ksize):
            out = out + jnp.einsum("oc,ncl->nol", w[:, :, k],
                                   yp[:, :, k:k + length])
        return out + b[None, :, None]

    h = circ_conv(_leaky_relu(x.astype(jnp.float32), alpha), w1, b1)
    return circ_conv(_leaky_relu(h, alpha), w2, b2)


if __name__ == "__main__":
    key = jax.random.PRNGKey(0)
    kx, kp = jax.random.split(key)

    batch, in_ch, out_ch, length = 2, 4, 8, 16
    x = jax.random.normal(kx, (batch, in_ch, length), dtype=jnp.float32)

    model = ResD(in_ch, out_ch, kp)
    out = model(x)
    out = jax.block_until_ready(out)

    assert out.shape == (batch, out_ch, length), out.shape
    assert bool(jnp.all(jnp.isfinite(out)))

    ref = res_d_reference(x, model.w1, model.b1, model.w2, model.b2)
    assert jnp.allclose(out, ref, rtol=2e-4, atol=2e-4), (
        float(jnp.max(jnp.abs(out - ref))))

    print("KERNEL_OK")
</pallas_src>

<mosaic_0001>
module attributes {stable_mosaic.version = 11 : i64} {
  func.func @_res_d_fused_kernel(%arg0: i32, %arg1: memref<1x4x16xf32, #tpu.memory_space<vmem>>, %arg2: memref<8x20xf32, #tpu.memory_space<vmem>>, %arg3: memref<8x1xf32, #tpu.memory_space<vmem>>, %arg4: memref<8x40xf32, #tpu.memory_space<vmem>>, %arg5: memref<8x1xf32, #tpu.memory_space<vmem>>, %arg6: memref<1x8x16xf32, #tpu.memory_space<vmem>>) attributes {dimension_semantics = [#tpu.dimension_semantics<parallel>], iteration_bounds = array<i64: 2>, scalar_prefetch = 0 : i64, scratch_operands = 0 : i64, tpu.core_type = #tpu.core_type<tc>, window_params = [{transform_indices = @transform_0, window_bounds = array<i64: 1, 4, 16>}, {pipeline_mode = #tpu.pipeline_mode<synchronous>, transform_indices = @transform_1, window_bounds = array<i64: 8, 20>}, {pipeline_mode = #tpu.pipeline_mode<synchronous>, transform_indices = @transform_2, window_bounds = array<i64: 8, 1>}, {pipeline_mode = #tpu.pipeline_mode<synchronous>, transform_indices = @transform_3, window_bounds = array<i64: 8, 40>}, {pipeline_mode = #tpu.pipeline_mode<synchronous>, transform_indices = @transform_4, window_bounds = array<i64: 8, 1>}, {transform_indices = @transform_5, window_bounds = array<i64: 1, 8, 16>}]} {
    %c0 = arith.constant 0 : index
    %c0_0 = arith.constant 0 : index
    %c0_1 = arith.constant 0 : index
    %0 = vector.load %arg1[%c0, %c0_0, %c0_1] : memref<1x4x16xf32, #tpu.memory_space<vmem>>, vector<1x4x16xf32>
    %1 = vector.extract_strided_slice %0 {offsets = [0, 0, 12], sizes = [1, 4, 4], strides = [1, 1, 1]} : vector<1x4x16xf32> to vector<1x4x4xf32>
    %2 = vector.extract_strided_slice %0 {offsets = [0, 0, 0], sizes = [1, 4, 4], strides = [1, 1, 1]} : vector<1x4x16xf32> to vector<1x4x4xf32>
    %3 = tpu.concatenate %1, %0, %2 in 2 : vector<1x4x4xf32>, vector<1x4x16xf32>, vector<1x4x4xf32> -> vector<1x4x24xf32>
    %cst = arith.constant 0.000000e+00 : f32
    %4 = vector.broadcast %cst : f32 to vector<1x4x24xf32>
    %5 = arith.cmpf oge, %3, %4 : vector<1x4x24xf32>
    %cst_2 = arith.constant 2.000000e-01 : f32
    %6 = vector.broadcast %cst_2 : f32 to vector<1x4x24xf32>
    %7 = arith.mulf %6, %3 : vector<1x4x24xf32>
    %8 = arith.select %5, %3, %7 : vector<1x4x24xi1>, vector<1x4x24xf32>
    %9 = vector.extract_strided_slice %8 {offsets = [0, 0, 0], sizes = [1, 4, 20], strides = [1, 1, 1]} : vector<1x4x24xf32> to vector<1x4x20xf32>
    %10 = vector.extract_strided_slice %8 {offsets = [0, 0, 1], sizes = [1, 4, 20], strides = [1, 1, 1]} : vector<1x4x24xf32> to vector<1x4x20xf32>
    %11 = vector.extract_strided_slice %8 {offsets = [0, 0, 2], sizes = [1, 4, 20], strides = [1, 1, 1]} : vector<1x4x24xf32> to vector<1x4x20xf32>
    %12 = vector.extract_strided_slice %8 {offsets = [0, 0, 3], sizes = [1, 4, 20], strides = [1, 1, 1]} : vector<1x4x24xf32> to vector<1x4x20xf32>
    %13 = vector.extract_strided_slice %8 {offsets = [0, 0, 4], sizes = [1, 4, 20], strides = [1, 1, 1]} : vector<1x4x24xf32> to vector<1x4x20xf32>
    %14 = tpu.concatenate %9, %10, %11, %12, %13 in 1 : vector<1x4x20xf32>, vector<1x4x20xf32>, vector<1x4x20xf32>, vector<1x4x20xf32>, vector<1x4x20xf32> -> vector<1x20x20xf32>
    %c0_3 = arith.constant 0 : index
    %c0_4 = arith.constant 0 : index
    %15 = vector.load %arg2[%c0_3, %c0_4] : memref<8x20xf32, #tpu.memory_space<vmem>>, vector<8x20xf32>
    %c0_5 = arith.constant 0 : index
    %c0_6 = arith.constant 0 : index
    %16 = vector.load %arg3[%c0_5, %c0_6] : memref<8x1xf32, #tpu.memory_space<vmem>>, vector<8x1xf32>
    "tpu.trace_start"() <{level = 10 : i32, message = "oc,ncl->nol"}> : () -> ()
    %cst_7 = arith.constant dense<0.000000e+00> : vector<1x20x8xf32>
    %17 = tpu.matmul %14, %15, %cst_7 {dimension_numbers = #tpu.dot_dimension_numbers<[1], [1], [0, 2], [0], [0, 0, 0, 2, 1, 0], [], []>} : vector<1x20x20xf32>, vector<8x20xf32>, vector<1x20x8xf32> -> vector<1x20x8xf32>
    %18 = tpu.transpose %17, [0, 2, 1] : vector<1x20x8xf32> -> vector<1x8x20xf32>
    "tpu.trace_stop"() : () -> ()
    %19 = vector.shape_cast %16 : vector<8x1xf32> to vector<1x8x1xf32>
    %20 = vector.broadcast %19 : vector<1x8x1xf32> to vector<1x8x20xf32>
    %21 = arith.addf %18, %20 : vector<1x8x20xf32>
    %cst_8 = arith.constant 0.000000e+00 : f32
    %22 = vector.broadcast %cst_8 : f32 to vector<1x8x20xf32>
    %23 = arith.cmpf oge, %21, %22 : vector<1x8x20xf32>
    %cst_9 = arith.constant 2.000000e-01 : f32
    %24 = vector.broadcast %cst_9 : f32 to vector<1x8x20xf32>
    %25 = arith.mulf %24, %21 : vector<1x8x20xf32>
    %26 = arith.select %23, %21, %25 : vector<1x8x20xi1>, vector<1x8x20xf32>
    %27 = vector.extract_strided_slice %26 {offsets = [0, 0, 0], sizes = [1, 8, 16], strides = [1, 1, 1]} : vector<1x8x20xf32> to vector<1x8x16xf32>
    %28 = vector.extract_strided_slice %26 {offsets = [0, 0, 1], sizes = [1, 8, 16], strides = [1, 1, 1]} : vector<1x8x20xf32> to vector<1x8x16xf32>
    %29 = vector.extract_strided_slice %26 {offsets = [0, 0, 2], sizes = [1, 8, 16], strides = [1, 1, 1]} : vector<1x8x20xf32> to vector<1x8x16xf32>
    %30 = vector.extract_strided_slice %26 {offsets = [0, 0, 3], sizes = [1, 8, 16], strides = [1, 1, 1]} : vector<1x8x20xf32> to vector<1x8x16xf32>
    %31 = vector.extract_strided_slice %26 {offsets = [0, 0, 4], sizes = [1, 8, 16], strides = [1, 1, 1]} : vector<1x8x20xf32> to vector<1x8x16xf32>
    %32 = tpu.concatenate %27, %28, %29, %30, %31 in 1 : vector<1x8x16xf32>, vector<1x8x16xf32>, vector<1x8x16xf32>, vector<1x8x16xf32>, vector<1x8x16xf32> -> vector<1x40x16xf32>
    %c0_10 = arith.constant 0 : index
    %c0_11 = arith.constant 0 : index
    %33 = vector.load %arg4[%c0_10, %c0_11] : memref<8x40xf32, #tpu.memory_space<vmem>>, vector<8x40xf32>
    %c0_12 = arith.constant 0 : index
    %c0_13 = arith.constant 0 : index
    %34 = vector.load %arg5[%c0_12, %c0_13] : memref<8x1xf32, #tpu.memory_space<vmem>>, vector<8x1xf32>
    "tpu.trace_start"() <{level = 10 : i32, message = "oc,ncl->nol"}> : () -> ()
    %cst_14 = arith.constant dense<0.000000e+00> : vector<1x16x8xf32>
    %35 = tpu.matmul %32, %33, %cst_14 {dimension_numbers = #tpu.dot_dimension_numbers<[1], [1], [0, 2], [0], [0, 0, 0, 2, 1, 0], [], []>} : vector<1x40x16xf32>, vector<8x40xf32>, vector<1x16x8xf32> -> vector<1x16x8xf32>
    %36 = tpu.transpose %35, [0, 2, 1] : vector<1x16x8xf32> -> vector<1x8x16xf32>
    "tpu.trace_stop"() : () -> ()
    %37 = vector.shape_cast %34 : vector<8x1xf32> to vector<1x8x1xf32>
    %38 = vector.broadcast %37 : vector<1x8x1xf32> to vector<1x8x16xf32>
    %39 = arith.addf %36, %38 : vector<1x8x16xf32>
    %c0_15 = arith.constant 0 : index
    %c0_16 = arith.constant 0 : index
    %c0_17 = arith.constant 0 : index
    %40 = vector.load %arg6[%c0_15, %c0_16, %c0_17] : memref<1x8x16xf32, #tpu.memory_space<vmem>>, vector<1x8x16xf32>
    tpu.vector_store %arg6[%c0_15, %c0_16, %c0_17], %39 {strides = array<i32>} : memref<1x8x16xf32, #tpu.memory_space<vmem>>, vector<1x8x16xf32>,
    return
  }
  func.func @transform_0(%arg0: i32) -> (i32, i32, i32) {
    %c0_i32 = arith.constant 0 : i32
    %c0_i32_0 = arith.constant 0 : i32
    %c0_i32_1 = arith.constant 0 : i32
    return %arg0, %c0_i32, %c0_i32_0 : i32, i32, i32
  }
  func.func @transform_1(%arg0: i32) -> (i32, i32) {
    %c0_i32 = arith.constant 0 : i32
    %c0_i32_0 = arith.constant 0 : i32
    %c0_i32_1 = arith.constant 0 : i32
    return %c0_i32, %c0_i32_0 : i32, i32
  }
  func.func @transform_2(%arg0: i32) -> (i32, i32) {
    %c0_i32 = arith.constant 0 : i32
    %c0_i32_0 = arith.constant 0 : i32
    %c0_i32_1 = arith.constant 0 : i32
    return %c0_i32, %c0_i32_0 : i32, i32
  }
  func.func @transform_3(%arg0: i32) -> (i32, i32) {
    %c0_i32 = arith.constant 0 : i32
    %c0_i32_0 = arith.constant 0 : i32
    %c0_i32_1 = arith.constant 0 : i32
    return %c0_i32, %c0_i32_0 : i32, i32
  }
  func.func @transform_4(%arg0: i32) -> (i32, i32) {
    %c0_i32 = arith.constant 0 : i32
    %c0_i32_0 = arith.constant 0 : i32
    %c0_i32_1 = arith.constant 0 : i32
    return %c0_i32, %c0_i32_0 : i32, i32
  }
  func.func @transform_5(%arg0: i32) -> (i32, i32, i32) {
    %c0_i32 = arith.constant 0 : i32
    %c0_i32_0 = arith.constant 0 : i32
    %c0_i32_1 = arith.constant 0 : i32
    return %arg0, %c0_i32, %c0_i32_0 : i32, i32, i32
  }
}

</mosaic_0001>

<llo_original>
// kernel: tpu_custom_call.1
$region0: #{tpu_custom_call.1}
  #allocation0 [shape = 'u32[]', space=smem, size = 0x4, offset = 0x4, fixed_abs, tag = 'smem constant byte address 0x4 - core index']
  #allocation1 [shape = 'u32[144,128]{1,0:T(1,128)}', space=vmem, size = 0x12000, scoped, tag = 'internal scratch']
  %s0 = inlined_call_operand.vmem [shape: f32[2,4,16], index: 0, kind: input, shape index: {}]
  %s1 = inlined_call_operand.vmem [shape: f32[8,20], index: 1, kind: input, shape index: {}]
  %s2 = inlined_call_operand.vmem [shape: f32[8,1], index: 2, kind: input, shape index: {}]
  %s3 = inlined_call_operand.hbm [shape: f32[8,40], index: 3, kind: input, shape index: {}]
  %s4 = inlined_call_operand.vmem [shape: f32[8,1], index: 4, kind: input, shape index: {}]
  %s5 = inlined_call_operand.hbm [shape: f32[2,8,16], index: 5, kind: output, shape index: {}]
  %s6 = sld [smem:[#allocation0]]
  $region57: #{tpu_custom_call.1} parent=0
    _
  %s8 = ssub.s32 1, %s6
  %s9 = scalar_select 0, %s8, %s6
  $region1: #{tpu_custom_call.1} parent=0
    #allocation2 [shape = 'u8[4096]{0}', space=vmem, size = 0x1000, scoped, tag = 'input window, operand 3, single buffered']
    #allocation3 [shape = 's32[2]{0}', space=sflag, size = 0x8, scoped, tag = 'scoped memory for tpu_custom_call.1']
    #allocation4 [shape = 's32[2]{0}', space=sflag, size = 0x8, scoped, tag = 'scoped memory for tpu_custom_call.1']
    #allocation5 [shape = 'u8[8192]{0}', space=vmem, size = 0x2000, scoped, tag = 'output window, operand 0']
    %10 = vsyncpa [#allocation3], 0
    %11 = vsyncpa [#allocation4], 0
    %s12 = scalar_lea.sflag [#allocation4], 1
    %13 = vsyncpa %s12, 0
    loop: start=0, step=1, limit=4
    $region2: #{tpu_custom_call.1} parent=1 // loop_pre_header
      _
    $region3: #{tpu_custom_call.1} parent=1 // loop_header
      %s15 = sphi 0, %s19
      %p16 = scmp.ge.s32.totalorder %s15, 4
      %s25 = sphi 0, %s27
      %s28 = sphi 0, %s25
      %s29 = sphi 0, %s28
      %s45 = sphi 0, %s29
      %s49 = sphi 0, %s49
      %s51 = sphi 0, %s49
      %s52 = sphi 0, %s51
      %s66 = sphi 0, %s52
      %s70 = sphi 0, %s70
      %s72 = sphi 0, %s70
      %s73 = sphi 0, %s72
      %s87 = sphi 0, %s73
      %s91 = sphi 0, %s91
      %s93 = sphi 0, %s91
      %s94 = sphi 0, %s93
      %s108 = sphi 0, %s94
      %s112 = sphi 0, %s112
      %s114 = sphi 0, %s112
      %s115 = sphi 0, %s114
      %s129 = sphi 0, %s115
      %s135 = sphi 0, %s137
      %s138 = sphi 0, %s135
      %s139 = sphi 0, %s138
      %s155 = sphi 0, %s139
    $region4: #{tpu_custom_call.1} parent=1 // loop_header_branch
      %18 = sbr.rel (%p16) target = $region8
    $region5: #{tpu_custom_call.1} parent=1 // loop_body
      %s20 = ssub.s32 %s15, 1
      %s21 = ssub.s32 %s15, 2
      %s22 = sadd.s32 %s15, 1
      %s23 = ssub.s32 %s15, %s22
      %p24 = scmp.eq.s32.totalorder %s23, 0
      %s26 = sadd.s32 %s25, 1
      %s27 = scalar_select %p24, %s25, %s26
      %p30 = pneg %p24
      %p31 = scmp.eq.s32.totalorder %s15, 1
      %p32 = por %p30, %p31
      %p33 = scmp.ne.s32.totalorder %s25, %s28
      %p34 = scmp.eq.s32.totalorder %s15, 0
      %p35 = por %p33, %p34
      %p36 = scmp.ne.s32.totalorder %s25, %s28
      %p37 = scmp.eq.s32.totalorder %s20, 1
      %p38 = por %p36, %p37
      %p39 = scmp.ne.s32.totalorder %s28, %s29
      %p40 = scmp.eq.s32.totalorder %s20, 0
      %p41 = por %p39, %p40
      %p42 = scmp.ne.s32.totalorder %s28, %s29
      %p43 = scmp.eq.s32.totalorder %s21, 1
      %p44 = por %p42, %p43
      %p46 = scmp.ne.s32.totalorder %s29, %s45
      %p47 = scmp.eq.s32.totalorder %s21, 0
      %p48 = por %p46, %p47
      %s50 = sadd.s32 %s49, 1
      %p53 = scmp.eq.s32.totalorder %s15, 1
      %p54 = scmp.ne.s32.totalorder %s49, %s51
      %p55 = scmp.eq.s32.totalorder %s15, 0
      %p56 = por %p54, %p55
      %p57 = scmp.ne.s32.totalorder %s49, %s51
      %p58 = scmp.eq.s32.totalorder %s20, 1
      %p59 = por %p57, %p58
      %p60 = scmp.ne.s32.totalorder %s51, %s52
      %p61 = scmp.eq.s32.totalorder %s20, 0
      %p62 = por %p60, %p61
      %p63 = scmp.ne.s32.totalorder %s51, %s52
      %p64 = scmp.eq.s32.totalorder %s21, 1
      %p65 = por %p63, %p64
      %p67 = scmp.ne.s32.totalorder %s52, %s66
      %p68 = scmp.eq.s32.totalorder %s21, 0
      %p69 = por %p67, %p68
      %s71 = sadd.s32 %s70, 1
      %p74 = scmp.eq.s32.totalorder %s15, 1
      %p75 = scmp.ne.s32.totalorder %s70, %s72
      %p76 = scmp.eq.s32.totalorder %s15, 0
      %p77 = por %p75, %p76
      %p78 = scmp.ne.s32.totalorder %s70, %s72
      %p79 = scmp.eq.s32.totalorder %s20, 1
      %p80 = por %p78, %p79
      %p81 = scmp.ne.s32.totalorder %s72, %s73
      %p82 = scmp.eq.s32.totalorder %s20, 0
      %p83 = por %p81, %p82
      %p84 = scmp.ne.s32.totalorder %s72, %s73
      %p85 = scmp.eq.s32.totalorder %s21, 1
      %p86 = por %p84, %p85
      %p88 = scmp.ne.s32.totalorder %s73, %s87
      %p89 = scmp.eq.s32.totalorder %s21, 0
      %p90 = por %p88, %p89
      %s92 = sadd.s32 %s91, 1
      %p95 = scmp.eq.s32.totalorder %s15, 1
      %p96 = scmp.ne.s32.totalorder %s91, %s93
      %p97 = scmp.eq.s32.totalorder %s15, 0
      %p98 = por %p96, %p97
      %p99 = scmp.ne.s32.totalorder %s91, %s93
      %p100 = scmp.eq.s32.totalorder %s20, 1
      %p101 = por %p99, %p100
      %p102 = scmp.ne.s32.totalorder %s93, %s94
      %p103 = scmp.eq.s32.totalorder %s20, 0
      %p104 = por %p102, %p103
      %p105 = scmp.ne.s32.totalorder %s93, %s94
      %p106 = scmp.eq.s32.totalorder %s21, 1
      %p107 = por %p105, %p106
      %p109 = scmp.ne.s32.totalorder %s94, %s108
      %p110 = scmp.eq.s32.totalorder %s21, 0
      %p111 = por %p109, %p110
      %s113 = sadd.s32 %s112, 1
      %p116 = scmp.eq.s32.totalorder %s15, 1
      %p117 = scmp.ne.s32.totalorder %s112, %s114
      %p118 = scmp.eq.s32.totalorder %s15, 0
      %p119 = por %p117, %p118
      %p120 = scmp.ne.s32.totalorder %s112, %s114
      %p121 = scmp.eq.s32.totalorder %s20, 1
      %p122 = por %p120, %p121
      %p123 = scmp.ne.s32.totalorder %s114, %s115
      %p124 = scmp.eq.s32.totalorder %s20, 0
      %p125 = por %p123, %p124
      %p126 = scmp.ne.s32.totalorder %s114, %s115
      %p127 = scmp.eq.s32.totalorder %s21, 1
      %p128 = por %p126, %p127
      %p130 = scmp.ne.s32.totalorder %s115, %s129
      %p131 = scmp.eq.s32.totalorder %s21, 0
      %p132 = por %p130, %p131
      %s133 = ssub.s32 %s15, %s22
      %p134 = scmp.eq.s32.totalorder %s133, 0
      %s136 = sadd.s32 %s135, 1
      %s137 = scalar_select %p134, %s135, %s136
      %p140 = pneg %p134
      %p141 = scmp.eq.s32.totalorder %s15, 1
      %p142 = por %p140, %p141
      %p143 = scmp.ne.s32.totalorder %s135, %s138
      %p144 = scmp.eq.s32.totalorder %s15, 0
      %p145 = por %p143, %p144
      %p146 = scmp.ne.s32.totalorder %s135, %s138
      %p147 = scmp.eq.s32.totalorder %s20, 1
      %p148 = por %p146, %p147
      %p149 = scmp.ne.s32.totalorder %s138, %s139
      %p150 = scmp.eq.s32.totalorder %s20, 0
      %p151 = por %p149, %p150
      %p152 = scmp.ne.s32.totalorder %s138, %s139
      %p153 = scmp.eq.s32.totalorder %s21, 1
      %p154 = por %p152, %p153
      %p156 = scmp.ne.s32.totalorder %s139, %s155
      %p157 = scmp.eq.s32.totalorder %s21, 0
      %p158 = por %p156, %p157
      %p159 = scmp.le.s32.totalorder 1, %s15
      %p160 = scmp.lt.s32.totalorder %s15, 3
      %p161 = pnand %p159, %p160
      %p162 = pneg %p161
      // Predicated region
      $region9: #{tpu_custom_call.1} parent=5 // pred_check
        _
      $region10: #{tpu_custom_call.1} parent=5 // pred_check_branch
        %164 = sbr.rel (%p161) target = $region12
      $region11: #{tpu_custom_call.1} parent=5 // pred_region
        %s165 = ssub.s32 %s15, 1
        // Predicated region
        $region13: #{tpu_custom_call.1} parent=11 // pred_check
          %p166 = pneg %p62
        $region14: #{tpu_custom_call.1} parent=11 // pred_check_branch
          %168 = sbr.rel (%p166) target = $region16
        $region15: #{tpu_custom_call.1} parent=11 // pred_region
          _
        $region16: #{tpu_custom_call.1} parent=11 // pred_fallthru
          _
        // Predicated region
        $region17: #{tpu_custom_call.1} parent=11 // pred_check
          %p169 = pneg %p83
        $region18: #{tpu_custom_call.1} parent=11 // pred_check_branch
          %171 = sbr.rel (%p169) target = $region20
        $region19: #{tpu_custom_call.1} parent=11 // pred_region
          _
        $region20: #{tpu_custom_call.1} parent=11 // pred_fallthru
          _
        // Predicated region
        $region21: #{tpu_custom_call.1} parent=11 // pred_check
          %p172 = pneg %p104
        $region22: #{tpu_custom_call.1} parent=11 // pred_check_branch
          %174 = sbr.rel (%p172) target = $region24
        $region23: #{tpu_custom_call.1} parent=11 // pred_region
          %s176 = ssub.s32 128, 128
          %177 = vsyncadd [#allocation3], %s176
          %s179 = sshll.u32 [#allocation2], 4
          %s180 = int_to_ptr.vmem [resolvable:$true] %s179
          %182 = dma.hbm_to_vmem [thread:$0]  %s3, 128, %s180, [#allocation3]
        $region24: #{tpu_custom_call.1} parent=11 // pred_fallthru
          _
        // Predicated region
        $region25: #{tpu_custom_call.1} parent=11 // pred_check
          %p183 = pneg %p125
        $region26: #{tpu_custom_call.1} parent=11 // pred_check_branch
          %185 = sbr.rel (%p183) target = $region28
        $region27: #{tpu_custom_call.1} parent=11 // pred_region
          _
        $region28: #{tpu_custom_call.1} parent=11 // pred_fallthru
          _
      $region12: #{tpu_custom_call.1} parent=5 // pred_fallthru
        _
      %p186 = scmp.lt.s32.totalorder %s15, 2
      // Predicated region
      $region29: #{tpu_custom_call.1} parent=5 // pred_check
        %p187 = pneg %p186
      $region30: #{tpu_custom_call.1} parent=5 // pred_check_branch
        %189 = sbr.rel (%p187) target = $region32
      $region31: #{tpu_custom_call.1} parent=5 // pred_region
        // Predicated region
        $region33: #{tpu_custom_call.1} parent=31 // pred_check
          %p190 = pneg %p35
        $region34: #{tpu_custom_call.1} parent=31 // pred_check_branch
          %192 = sbr.rel (%p190) target = $region36
        $region35: #{tpu_custom_call.1} parent=31 // pred_region
          %p193 = scmp.lt.s32.totalorder %s15, 1
          %s194 = scalar_select %p193, %s15, 1
          %s195 = smul.addr %s194, 4
          %s196 = scalar_lea.vmem %s0, %s195
        $region36: #{tpu_custom_call.1} parent=31 // pred_fallthru
          _
      $region32: #{tpu_custom_call.1} parent=5 // pred_fallthru
        _
      %p197 = scmp.le.s32.totalorder 1, %s15
      %p198 = scmp.lt.s32.totalorder %s15, 3
      %p199 = pnand %p197, %p198
      %p200 = pneg %p199
      // Predicated region
      $region37: #{tpu_custom_call.1} parent=5 // pred_check
        _
      $region38: #{tpu_custom_call.1} parent=5 // pred_check_branch
        %202 = sbr.rel (%p199) target = $region40
      $region39: #{tpu_custom_call.1} parent=5 // pred_region
        %s203 = ssub.s32 %s15, 1
        // Predicated region
        $region41: #{tpu_custom_call.1} parent=39 // pred_check
          %p204 = pneg %p104
        $region42: #{tpu_custom_call.1} parent=39 // pred_check_branch
          %206 = sbr.rel (%p204) target = $region44
        $region43: #{tpu_custom_call.1} parent=39 // pred_region
          %207 = dma.done [#allocation3], 128
        $region44: #{tpu_custom_call.1} parent=39 // pred_fallthru
          _
        %p208 = scmp.lt.s32.totalorder %s20, 1
        %s209 = scalar_select %p208, %s20, 1
        %s210 = smul.addr %s209, 4
        %s211 = scalar_lea.vmem %s0, %s210
        %p212 = pneg %p41
        %p213 = pneg %p38
        %p214 = pneg %p62
        %p215 = pneg %p59
        %p216 = pneg %p83
        %p217 = pneg %p80
        %p218 = pneg %p104
        %p219 = pneg %p101
        %p220 = pneg %p125
        %p221 = pneg %p122
        %p222 = pneg %p151
        %p223 = pneg %p148
        %s224 = sand.u32 %s138, 1
        %s225 = scalar_lea.sflag [#allocation4], %s224
        %s226 = sand.u32 %s138, 1
        %s227 = smul.addr %s226, 8
        %s228 = scalar_lea.vmem [#allocation5], %s227
        %p229 = scmp.lt.s32.totalorder %s20, 1
        %s230 = scalar_select %p229, %s20, 1
        %s231 = smul.addr %s230, 4
        %s232 = scalar_lea.vmem %s0, %s231
        %v233 = vld [vmem:[%s232] sm:$0xf]
        %235 = vrot.lane.b32.xlu0 %v233, 116
        %v236 = vpop.permute.xlu0 %235
        %238 = vrot.lane.b32.xlu0 %v233, 4
        %v239 = vpop.permute.xlu0 %238
        %241 = vrot.lane.b32.xlu0 %v233, 20
        %v242 = vpop.permute.xlu0 %241
        %vm244 = vcmask 31744
        %v245 = vsel %vm244, %v236, %v239
        %vm246 = vcmask 162816
        %v247 = vsel %vm246, %v245, %v242
        %vm248 = vcmp.ge.f32.partialorder %v247, 0.0
        %v249 = vmul.f32 %v247, 0.2
        %v250 = vsel %vm248, %v247, %v249
        %v252 = vrot.slane %v250, 4
        %253 = vrot.lane.b32.xlu0 %v252, 127
        %v254 = vpop.permute.xlu0 %253
        %256 = vrot.lane.b32.xlu0 %v250, 126
        %v257 = vpop.permute.xlu0 %256
        %259 = vrot.lane.b32.xlu0 %v252, 125
        %v260 = vpop.permute.xlu0 %259
        %262 = vrot.lane.b32.xlu0 %v250, 124
        %v263 = vpop.permute.xlu0 %262
        %vm265 = vcmask 1043456
        %v266 = vsel %vm265, %v250, %v254
        %v267 = vsel %vm265, %v257, %v260
        %v268 = vld [vmem:[%s1] sm:$0xff]
        %v269 = vld [vmem:[%s2] sm:$0xff]
        %270 = vxpose.xlu0.b32.start [1/16] %v266, 128
        %271 = vxpose.xlu0.b32.cont [2/16] %v267, 128
        %272 = vxpose.xlu0.b32.cont [3/16] %v263, 128
        %273 = vxpose.xlu0.b32.cont [4/16] 0.0, 128
        %274 = vxpose.xlu0.b32.cont [5/16] 0.0, 128
        %275 = vxpose.xlu0.b32.cont [6/16] 0.0, 128
        %276 = vxpose.xlu0.b32.cont [7/16] 0.0, 128
        %277 = vxpose.xlu0.b32.cont [8/16] 0.0, 128
        %278 = vxpose.xlu0.b32.cont [9/16] 0.0, 128
        %279 = vxpose.xlu0.b32.cont [10/16] 0.0, 128
        %280 = vxpose.xlu0.b32.cont [11/16] 0.0, 128
        %281 = vxpose.xlu0.b32.cont [12/16] 0.0, 128
        %282 = vxpose.xlu0.b32.cont [13/16] 0.0, 128
        %283 = vxpose.xlu0.b32.cont [14/16] 0.0, 128
        %284 = vxpose.xlu0.b32.cont [15/16] 0.0, 128
        %285 = vxpose.xlu0.b32.end [16/16] 0.0, 128
        %v286 = vpop.trf.xlu0
        %v287 = vpop.trf.xlu0
        %v288 = vpop.trf.xlu0
        %v289 = vpop.trf.xlu0
        %v290 = vpop.trf.xlu0
        %v291 = vpop.trf.xlu0
        %v292 = vpop.trf.xlu0
        %v293 = vpop.trf.xlu0
        %v294 = vpop.trf.xlu0
        %v295 = vpop.trf.xlu0
        %v296 = vpop.trf.xlu0
        %v297 = vpop.trf.xlu0
        %v298 = vpop.trf.xlu0
        %v299 = vpop.trf.xlu0
        %v300 = vpop.trf.xlu0
        %v301 = vpop.trf.xlu0
        %v303 = vsel %vm246, %v286, 0
        %v306 = vsel %vm246, %v287, 0
        %v309 = vsel %vm246, %v288, 0
        %v312 = vsel %vm246, %v268, 0
        %314 = vmatprep.subr.mxu0 0.0
        %315 = vmatpush1.xpose.msra.mxu0 0.0
        %316 = vmatprep.subr.mxu0 0.0
        %317 = vmatpush1.xpose.msra.mxu0 0.0
        %318 = vmatprep.subr.mxu0 0.0
        %319 = vmatpush1.xpose.msra.mxu0 0.0
        %320 = vmatprep.subr.mxu0 0.0
        %321 = vmatpush1.xpose.msra.mxu0 0.0
        %322 = vmatprep.subr.mxu0 0.0
        %323 = vmatpush1.xpose.msra.mxu0 0.0
        %324 = vmatprep.subr.mxu0 0.0
        %325 = vmatpush1.xpose.msra.mxu0 0.0
        %326 = vmatprep.subr.mxu0 0.0
        %327 = vmatpush1.xpose.msra.mxu0 0.0
        %328 = vmatprep.subr.mxu0 0.0
        %329 = vmatpush1.xpose.msra.mxu0 0.0
        %330 = vmatprep.subr.mxu0 0.0
        %331 = vmatpush1.xpose.msra.mxu0 0.0
        %332 = vmatprep.subr.mxu0 0.0
        %333 = vmatpush1.xpose.msra.mxu0 0.0
        %334 = vmatprep.subr.mxu0 0.0
        %335 = vmatpush1.xpose.msra.mxu0 0.0
        %336 = vmatprep.subr.mxu0 0.0
        %337 = vmatpush1.xpose.msra.mxu0 0.0
        %338 = vmatprep.subr.mxu0 0.0
        %339 = vmatpush1.xpose.msra.mxu0 0.0
        %340 = vmatprep.subr.mxu0 0.0
        %341 = vmatpush1.xpose.msra.mxu0 0.0
        %342 = vmatprep.subr.mxu0 0.0
        %343 = vmatpush1.xpose.msra.mxu0 0.0
        %344 = vmatprep.subr.mxu0 0.0
        %345 = vmatpush1.xpose.msra.mxu0 %v312
        %346 = vmatprep.subr.mxu0 0.0
        %347 = vmatpush2.xpose.msra.mxu0 0.0
        %348 = vmatprep.subr.mxu0 0.0
        %349 = vmatpush2.xpose.msra.mxu0 0.0
        %350 = vmatprep.subr.mxu0 0.0
        %351 = vmatpush2.xpose.msra.mxu0 0.0
        %352 = vmatprep.subr.mxu0 0.0
        %353 = vmatpush2.xpose.msra.mxu0 0.0
        %354 = vmatprep.subr.mxu0 0.0
        %355 = vmatpush2.xpose.msra.mxu0 0.0
        %356 = vmatprep.subr.mxu0 0.0
        %357 = vmatpush2.xpose.msra.mxu0 0.0
        %358 = vmatprep.subr.mxu0 0.0
        %359 = vmatpush2.xpose.msra.mxu0 0.0
        %360 = vmatprep.subr.mxu0 0.0
        %361 = vmatpush2.xpose.msra.mxu0 0.0
        %362 = vmatprep.subr.mxu0 0.0
        %363 = vmatpush2.xpose.msra.mxu0 0.0
        %364 = vmatprep.subr.mxu0 0.0
        %365 = vmatpush2.xpose.msra.mxu0 0.0
        %366 = vmatprep.subr.mxu0 0.0
        %367 = vmatpush2.xpose.msra.mxu0 0.0
        %368 = vmatprep.subr.mxu0 0.0
        %369 = vmatpush2.xpose.msra.mxu0 0.0
        %370 = vmatprep.subr.mxu0 0.0
        %371 = vmatpush2.xpose.msra.mxu0 0.0
        %372 = vmatprep.subr.mxu0 0.0
        %373 = vmatpush2.xpose.msra.mxu0 0.0
        %374 = vmatprep.subr.mxu0 0.0
        %375 = vmatpush2.xpose.msra.mxu0 0.0
        %376 = vmatprep.subr.mxu0 0.0
        %377 = vmatpush2.xpose.msra.mxu0 0.0
        %378 = vmatprep.mubr.f32.mxu0 0.0
        %379 = vmatmul.mubr.f32.gmra.mxu0 %v303
        %v380 = vpop.f32.mrf.mxu0
        %v381 = vadd.f32 0.0, %v380
        %v382 = vpop.f32.mrf.mxu0
        %383 = vmatprep.mubr.f32.mxu0 0.0
        %384 = vmatmul.mubr.f32.gmra.mxu0 %v306
        %v385 = vpop.f32.mrf.mxu0
        %v386 = vadd.f32 0.0, %v385
        %v387 = vpop.f32.mrf.mxu0
        %388 = vmatprep.mubr.f32.mxu0 0.0
        %389 = vmatmul.mubr.f32.gmra.mxu0 %v309
        %v390 = vpop.f32.mrf.mxu0
        %v391 = vadd.f32 0.0, %v390
        %v392 = vpop.f32.mrf.mxu0
        %393 = vdwg.mxu0
        %394 = vxpose.xlu0.b32.start [1/16] %v381, 128
        %395 = vxpose.xlu0.b32.cont [2/16] %v386, 128
        %396 = vxpose.xlu0.b32.cont [3/16] %v391, 128
        %397 = vxpose.xlu0.b32.cont [4/16] 0.0, 128
        %398 = vxpose.xlu0.b32.cont [5/16] 0.0, 128
        %399 = vxpose.xlu0.b32.cont [6/16] 0.0, 128
        %400 = vxpose.xlu0.b32.cont [7/16] 0.0, 128
        %401 = vxpose.xlu0.b32.cont [8/16] 0.0, 128
        %402 = vxpose.xlu0.b32.cont [9/16] 0.0, 128
        %403 = vxpose.xlu0.b32.cont [10/16] 0.0, 128
        %404 = vxpose.xlu0.b32.cont [11/16] 0.0, 128
        %405 = vxpose.xlu0.b32.cont [12/16] 0.0, 128
        %406 = vxpose.xlu0.b32.cont [13/16] 0.0, 128
        %407 = vxpose.xlu0.b32.cont [14/16] 0.0, 128
        %408 = vxpose.xlu0.b32.cont [15/16] 0.0, 128
        %409 = vxpose.xlu0.b32.end [16/16] 0.0, 128
        %v410 = vpop.trf.xlu0
        %v411 = vpop.trf.xlu0
        %v412 = vpop.trf.xlu0
        %v413 = vpop.trf.xlu0
        %v414 = vpop.trf.xlu0
        %v415 = vpop.trf.xlu0
        %v416 = vpop.trf.xlu0
        %v417 = vpop.trf.xlu0
        %v418 = vpop.trf.xlu0
        %v419 = vpop.trf.xlu0
        %v420 = vpop.trf.xlu0
        %v421 = vpop.trf.xlu0
        %v422 = vpop.trf.xlu0
        %v423 = vpop.trf.xlu0
        %v424 = vpop.trf.xlu0
        %v425 = vpop.trf.xlu0
        %427 = vset.pattern.permute.xlu0 0
        %428 = vperm.xlu0 %427, %v269
        %v429 = vpop.permute.xlu0 %428
        %v431 = vadd.f32 %v410, %v429
        %vm432 = vcmp.ge.f32.partialorder %v431, 0.0
        %v433 = vmul.f32 %v431, 0.2
        %v434 = vsel %vm432, %v431, %v433
        %436 = vrot.lane.b32.xlu0 %v434, 127
        %v437 = vpop.permute.xlu0 %436
        %439 = vrot.lane.b32.xlu0 %v434, 126
        %v440 = vpop.permute.xlu0 %439
        %442 = vrot.lane.b32.xlu0 %v434, 125
        %v443 = vpop.permute.xlu0 %442
        %445 = vrot.lane.b32.xlu0 %v434, 124
        %v446 = vpop.permute.xlu0 %445
        %v448 = vld [vmem:[#allocation2] sm:$0xff]
        %v449 = vld [vmem:[%s4] sm:$0xff]
        %450 = vxpose.xlu0.b32.start [1/16] %v434, 128
        %451 = vxpose.xlu0.b32.cont [2/16] %v437, 128
        %452 = vxpose.xlu0.b32.cont [3/16] %v440, 128
        %453 = vxpose.xlu0.b32.cont [4/16] %v443, 128
        %454 = vxpose.xlu0.b32.cont [5/16] %v446, 128
        %455 = vxpose.xlu0.b32.cont [6/16] 0.0, 128
        %456 = vxpose.xlu0.b32.cont [7/16] 0.0, 128
        %457 = vxpose.xlu0.b32.cont [8/16] 0.0, 128
        %458 = vxpose.xlu0.b32.cont [9/16] 0.0, 128
        %459 = vxpose.xlu0.b32.cont [10/16] 0.0, 128
        %460 = vxpose.xlu0.b32.cont [11/16] 0.0, 128
        %461 = vxpose.xlu0.b32.cont [12/16] 0.0, 128
        %462 = vxpose.xlu0.b32.cont [13/16] 0.0, 128
        %463 = vxpose.xlu0.b32.cont [14/16] 0.0, 128
        %464 = vxpose.xlu0.b32.cont [15/16] 0.0, 128
        %465 = vxpose.xlu0.b32.end [16/16] 0.0, 128
        %v466 = vpop.trf.xlu0
        %v467 = vpop.trf.xlu0
        %v468 = vpop.trf.xlu0
        %v469 = vpop.trf.xlu0
        %v470 = vpop.trf.xlu0
        %v471 = vpop.trf.xlu0
        %v472 = vpop.trf.xlu0
        %v473 = vpop.trf.xlu0
        %v474 = vpop.trf.xlu0
        %v475 = vpop.trf.xlu0
        %v476 = vpop.trf.xlu0
        %v477 = vpop.trf.xlu0
        %v478 = vpop.trf.xlu0
        %v479 = vpop.trf.xlu0
        %v480 = vpop.trf.xlu0
        %v481 = vpop.trf.xlu0
        %vm482 = vcmask 326656
        %v484 = vsel %vm482, %v466, 0
        %v487 = vsel %vm482, %v467, 0
        %v490 = vsel %vm482, %v448, 0
        %492 = vmatprep.subr.mxu0 0.0
        %493 = vmatpush1.xpose.msra.mxu0 0.0
        %494 = vmatprep.subr.mxu0 0.0
        %495 = vmatpush1.xpose.msra.mxu0 0.0
        %496 = vmatprep.subr.mxu0 0.0
        %497 = vmatpush1.xpose.msra.mxu0 0.0
        %498 = vmatprep.subr.mxu0 0.0
        %499 = vmatpush1.xpose.msra.mxu0 0.0
        %500 = vmatprep.subr.mxu0 0.0
        %501 = vmatpush1.xpose.msra.mxu0 0.0
        %502 = vmatprep.subr.mxu0 0.0
        %503 = vmatpush1.xpose.msra.mxu0 0.0
        %504 = vmatprep.subr.mxu0 0.0
        %505 = vmatpush1.xpose.msra.mxu0 0.0
        %506 = vmatprep.subr.mxu0 0.0
        %507 = vmatpush1.xpose.msra.mxu0 0.0
        %508 = vmatprep.subr.mxu0 0.0
        %509 = vmatpush1.xpose.msra.mxu0 0.0
        %510 = vmatprep.subr.mxu0 0.0
        %511 = vmatpush1.xpose.msra.mxu0 0.0
        %512 = vmatprep.subr.mxu0 0.0
        %513 = vmatpush1.xpose.msra.mxu0 0.0
        %514 = vmatprep.subr.mxu0 0.0
        %515 = vmatpush1.xpose.msra.mxu0 0.0
        %516 = vmatprep.subr.mxu0 0.0
        %517 = vmatpush1.xpose.msra.mxu0 0.0
        %518 = vmatprep.subr.mxu0 0.0
        %519 = vmatpush1.xpose.msra.mxu0 0.0
        %520 = vmatprep.subr.mxu0 0.0
        %521 = vmatpush1.xpose.msra.mxu0 0.0
        %522 = vmatprep.subr.mxu0 0.0
        %523 = vmatpush1.xpose.msra.mxu0 %v490
        %524 = vmatprep.subr.mxu0 0.0
        %525 = vmatpush2.xpose.msra.mxu0 0.0
        %526 = vmatprep.subr.mxu0 0.0
        %527 = vmatpush2.xpose.msra.mxu0 0.0
        %528 = vmatprep.subr.mxu0 0.0
        %529 = vmatpush2.xpose.msra.mxu0 0.0
        %530 = vmatprep.subr.mxu0 0.0
        %531 = vmatpush2.xpose.msra.mxu0 0.0
        %532 = vmatprep.subr.mxu0 0.0
        %533 = vmatpush2.xpose.msra.mxu0 0.0
        %534 = vmatprep.subr.mxu0 0.0
        %535 = vmatpush2.xpose.msra.mxu0 0.0
        %536 = vmatprep.subr.mxu0 0.0
        %537 = vmatpush2.xpose.msra.mxu0 0.0
        %538 = vmatprep.subr.mxu0 0.0
        %539 = vmatpush2.xpose.msra.mxu0 0.0
        %540 = vmatprep.subr.mxu0 0.0
        %541 = vmatpush2.xpose.msra.mxu0 0.0
        %542 = vmatprep.subr.mxu0 0.0
        %543 = vmatpush2.xpose.msra.mxu0 0.0
        %544 = vmatprep.subr.mxu0 0.0
        %545 = vmatpush2.xpose.msra.mxu0 0.0
        %546 = vmatprep.subr.mxu0 0.0
        %547 = vmatpush2.xpose.msra.mxu0 0.0
        %548 = vmatprep.subr.mxu0 0.0
        %549 = vmatpush2.xpose.msra.mxu0 0.0
        %550 = vmatprep.subr.mxu0 0.0
        %551 = vmatpush2.xpose.msra.mxu0 0.0
        %552 = vmatprep.subr.mxu0 0.0
        %553 = vmatpush2.xpose.msra.mxu0 0.0
        %554 = vmatprep.subr.mxu0 0.0
        %555 = vmatpush2.xpose.msra.mxu0 0.0
        %556 = vmatprep.mubr.f32.mxu0 0.0
        %557 = vmatmul.mubr.f32.gmra.mxu0 %v484
        %v558 = vpop.f32.mrf.mxu0
        %v559 = vadd.f32 0.0, %v558
        %v560 = vpop.f32.mrf.mxu0
        %561 = vmatprep.mubr.f32.mxu0 0.0
        %562 = vmatmul.mubr.f32.gmra.mxu0 %v487
        %v563 = vpop.f32.mrf.mxu0
        %v564 = vadd.f32 0.0, %v563
        %v565 = vpop.f32.mrf.mxu0
        %566 = vdwg.mxu0
        %567 = vxpose.xlu0.b32.start [1/16] %v559, 128
        %568 = vxpose.xlu0.b32.cont [2/16] %v564, 128
        %569 = vxpose.xlu0.b32.cont [3/16] 0.0, 128
        %570 = vxpose.xlu0.b32.cont [4/16] 0.0, 128
        %571 = vxpose.xlu0.b32.cont [5/16] 0.0, 128
        %572 = vxpose.xlu0.b32.cont [6/16] 0.0, 128
        %573 = vxpose.xlu0.b32.cont [7/16] 0.0, 128
        %574 = vxpose.xlu0.b32.cont [8/16] 0.0, 128
        %575 = vxpose.xlu0.b32.cont [9/16] 0.0, 128
        %576 = vxpose.xlu0.b32.cont [10/16] 0.0, 128
        %577 = vxpose.xlu0.b32.cont [11/16] 0.0, 128
        %578 = vxpose.xlu0.b32.cont [12/16] 0.0, 128
        %579 = vxpose.xlu0.b32.cont [13/16] 0.0, 128
        %580 = vxpose.xlu0.b32.cont [14/16] 0.0, 128
        %581 = vxpose.xlu0.b32.cont [15/16] 0.0, 128
        %582 = vxpose.xlu0.b32.end [16/16] 0.0, 128
        %v583 = vpop.trf.xlu0
        %v584 = vpop.trf.xlu0
        %v585 = vpop.trf.xlu0
        %v586 = vpop.trf.xlu0
        %v587 = vpop.trf.xlu0
        %v588 = vpop.trf.xlu0
        %v589 = vpop.trf.xlu0
        %v590 = vpop.trf.xlu0
        %v591 = vpop.trf.xlu0
        %v592 = vpop.trf.xlu0
        %v593 = vpop.trf.xlu0
        %v594 = vpop.trf.xlu0
        %v595 = vpop.trf.xlu0
        %v596 = vpop.trf.xlu0
        %v597 = vpop.trf.xlu0
        %v598 = vpop.trf.xlu0
        %600 = vset.pattern.permute.xlu0 0
        %601 = vperm.xlu0 %600, %v449
        %v602 = vpop.permute.xlu0 %601
        %v604 = vadd.f32 %v583, %v602
        %vm605 = vcmask 130048
        %606 = vst.msk [vmem:[%s228] sm:$0xff] %vm605, %v604
        %s607 = sand.u32 %s138, 1
        %s608 = scalar_lea.sflag [#allocation4], %s607
        %s609 = sand.u32 %s138, 1
        %s610 = smul.addr %s609, 8
        %s611 = scalar_lea.vmem [#allocation5], %s610
        // Predicated region
        $region45: #{tpu_custom_call.1} parent=39 // pred_check
          %p612 = pneg %p148
        $region46: #{tpu_custom_call.1} parent=39 // pred_check_branch
          %614 = sbr.rel (%p612) target = $region48
        $region47: #{tpu_custom_call.1} parent=39 // pred_region
          %s616 = ssub.s32 128, 128
          %617 = vsyncadd %s608, %s616
          %s618 = smul.addr %s20, 128
          %s619 = scalar_lea.hbm %s5, %s618
          %s621 = sshll.u32 %s611, 4
          %s622 = int_to_ptr.vmem [resolvable:$true] %s621
          %624 = dma.vmem_to_hbm [thread:$0]  %s622, 128, %s619, %s608
        $region48: #{tpu_custom_call.1} parent=39 // pred_fallthru
          _
      $region40: #{tpu_custom_call.1} parent=5 // pred_fallthru
        _
      %p625 = scmp.le.s32.totalorder 2, %s15
      // Predicated region
      $region49: #{tpu_custom_call.1} parent=5 // pred_check
        %p626 = pneg %p625
      $region50: #{tpu_custom_call.1} parent=5 // pred_check_branch
        %628 = sbr.rel (%p626) target = $region52
      $region51: #{tpu_custom_call.1} parent=5 // pred_region
        %s629 = ssub.s32 %s15, 2
        // Predicated region
        $region53: #{tpu_custom_call.1} parent=51 // pred_check
          %p630 = pneg %p154
        $region54: #{tpu_custom_call.1} parent=51 // pred_check_branch
          %632 = sbr.rel (%p630) target = $region56
        $region55: #{tpu_custom_call.1} parent=51 // pred_region
          %s633 = sand.u32 %s139, 1
          %s634 = scalar_lea.sflag [#allocation4], %s633
          %s635 = sand.u32 %s139, 1
          %s636 = smul.addr %s635, 8
          %s637 = scalar_lea.vmem [#allocation5], %s636
          %638 = dma.done %s634, 128
        $region56: #{tpu_custom_call.1} parent=51 // pred_fallthru
          _
      $region52: #{tpu_custom_call.1} parent=5 // pred_fallthru
        _
    $region6: #{tpu_custom_call.1} parent=1 // loop_footer
      %s19 = sadd.s32 1, %s15
    $region7: #{tpu_custom_call.1} parent=1 // loop_footer_branch
      %14 = sbr.rel target = $region3
    $region8: #{tpu_custom_call.1} parent=1 // loop_exit
      _
    %639 = vsyncpa [#allocation3], 1
    %s640 = scalar_lea.sflag [#allocation3], 1
    %641 = vsyncpa %s640, 1
    %642 = vsyncpa [#allocation4], 1
    %s643 = scalar_lea.sflag [#allocation4], 1
    %644 = vsyncpa %s643, 1

</llo_original>
